<compile_context>
chip_gen: v7x
topology: tpu7x:2x2x1
jax: 0.10.0
libtpu: 0.0.40
codegen_flags: <defaults>
</compile_context>

<pallas_src>
import jax
import jax.numpy as jnp
from jax.experimental import pallas as pl
from jax.experimental.pallas import tpu as pltpu


def _round_up(v, m):
    return ((v + m - 1) // m) * m


def nbeats_kernel(xr_ref, mask_ref, w1_ref, b12_ref, w2_ref, wt_ref, bt_ref,
                  out_ref, resid_ref, fc_ref):
    """One N-BEATS block per grid step; resid/forecast carried in VMEM scratch."""
    blk = pl.program_id(1)
    lp = resid_ref.shape[1]

    @pl.when(blk == 0)
    def _init():
        resid_ref[...] = xr_ref[...]
        # forecast starts as x[:, -1:] == first column of the flipped series
        fc_ref[...] = jnp.broadcast_to(xr_ref[:, 0:1], fc_ref.shape)

    resid = resid_ref[...]
    wdt = w1_ref.dtype          # f32 or bf16; accumulation is always f32

    h = jnp.maximum(
        jnp.dot(resid.astype(wdt), w1_ref[0],
                preferred_element_type=jnp.float32)
        + b12_ref[0, 0:1, :].astype(jnp.float32), 0.0)
    h = jnp.maximum(
        jnp.dot(h.astype(wdt), w2_ref[0],
                preferred_element_type=jnp.float32)
        + b12_ref[0, 1:2, :].astype(jnp.float32), 0.0)
    theta = (jnp.dot(h.astype(wdt), wt_ref[0],
                     preferred_element_type=jnp.float32)
             + bt_ref[0].astype(jnp.float32))

    backcast = theta[:, :lp]          # lane-aligned split (lp % 128 == 0)
    block_forecast = theta[:, lp:]

    resid_ref[...] = (resid - backcast) * mask_ref[...]
    fc_ref[...] = fc_ref[...] + block_forecast

    @pl.when(blk == pl.num_programs(1) - 1)
    def _finish():
        out_ref[...] = fc_ref[...].astype(out_ref.dtype)


def prepare_nbeats_params(w1, b1, w2, b2, wt, bt, *, weight_dtype=jnp.float32):
    """One-time (per model) weight prep: split/fuse theta, pad, pack, cast.

    w1:(NB,L,H) b1:(NB,1,H) w2:(NB,H,H) b2:(NB,1,H) wt:(NB,H,L+F) bt:(NB,1,L+F)
    """
    NB, L, H = w1.shape
    F = wt.shape[-1] - L
    Lp = _round_up(L, 128)
    Hp = _round_up(H, 128)
    Fp = _round_up(F, 128)

    w1_p = jnp.pad(w1, ((0, 0), (0, Lp - L), (0, Hp - H)))
    w2_p = jnp.pad(w2, ((0, 0), (0, Hp - H), (0, Hp - H)))
    # Fused theta projection: pad the backcast and forecast halves separately
    # so the in-kernel split at column Lp is lane-aligned and free.
    wb_p = jnp.pad(wt[:, :, :L], ((0, 0), (0, Hp - H), (0, Lp - L)))
    wf_p = jnp.pad(wt[:, :, L:], ((0, 0), (0, Hp - H), (0, Fp - F)))
    wt_p = jnp.concatenate([wb_p, wf_p], axis=-1)              # (NB, Hp, Lp+Fp)

    b12_p = jnp.concatenate(
        [jnp.pad(b1, ((0, 0), (0, 0), (0, Hp - H))),
         jnp.pad(b2, ((0, 0), (0, 0), (0, Hp - H)))], axis=1)  # (NB, 2, Hp)
    bb_p = jnp.pad(bt[:, :, :L], ((0, 0), (0, 0), (0, Lp - L)))
    bf_p = jnp.pad(bt[:, :, L:], ((0, 0), (0, 0), (0, Fp - F)))
    bt_p = jnp.concatenate([bb_p, bf_p], axis=-1)              # (NB, 1, Lp+Fp)

    return dict(
        w1=w1_p.astype(weight_dtype),
        b12=b12_p.astype(weight_dtype),
        w2=w2_p.astype(weight_dtype),
        wt=wt_p.astype(weight_dtype),
        bt=bt_p.astype(weight_dtype),
        dims=(NB, L, H, F, Lp, Hp, Fp),
    )


def nbeats_forward(x, input_mask, params):
    """x, input_mask: (B, L) float32; params from prepare_nbeats_params."""
    NB, L, H, F, Lp, Hp, Fp = params["dims"]
    B = x.shape[0]
    Tp = Lp + Fp

    # --- per-call glue: flip along time, zero-pad batch / lanes (exact)
    xr = jnp.flip(x, axis=1).astype(jnp.float32)
    mr = jnp.flip(input_mask, axis=1).astype(jnp.float32)

    Bp = _round_up(B, 8)
    BT = 128 if Bp > 128 else Bp        # batch tile (rows per grid step)
    Bp = _round_up(Bp, BT)
    xr_p = jnp.pad(xr, ((0, Bp - B), (0, Lp - L)))
    mr_p = jnp.pad(mr, ((0, Bp - B), (0, Lp - L)))

    # --- explicit scoped-VMEM budget (double-buffered blocks + scratch)
    w_item = jnp.dtype(params["w1"].dtype).itemsize
    w_block_bytes = (Lp * Hp + Hp * Hp + Hp * Tp + 2 * Hp + Tp) * w_item
    io_block_bytes = (2 * BT * Lp + BT * Fp) * 4
    scratch_bytes = (BT * Lp + BT * Fp) * 4
    vmem_limit = int(min(
        64 * 1024 * 1024,
        max(32 * 1024 * 1024,
            2 * (w_block_bytes + io_block_bytes) + scratch_bytes + (4 << 20))))

    grid_spec = pltpu.PrefetchScalarGridSpec(
        num_scalar_prefetch=0,
        grid=(Bp // BT, NB),             # batch tiles parallel, blocks streamed
        in_specs=[
            pl.BlockSpec((BT, Lp), lambda b, i: (b, 0)),        # flipped x
            pl.BlockSpec((BT, Lp), lambda b, i: (b, 0)),        # flipped mask
            pl.BlockSpec((1, Lp, Hp), lambda b, i: (i, 0, 0)),  # W1[i]
            pl.BlockSpec((1, 2, Hp), lambda b, i: (i, 0, 0)),   # [b1;b2][i]
            pl.BlockSpec((1, Hp, Hp), lambda b, i: (i, 0, 0)),  # W2[i]
            pl.BlockSpec((1, Hp, Tp), lambda b, i: (i, 0, 0)),  # [Wb|Wf][i]
            pl.BlockSpec((1, 1, Tp), lambda b, i: (i, 0, 0)),   # [bb|bf][i]
        ],
        out_specs=pl.BlockSpec((BT, Fp), lambda b, i: (b, 0)),
        scratch_shapes=[pltpu.VMEM((BT, Lp), jnp.float32),      # residuals
                        pltpu.VMEM((BT, Fp), jnp.float32)],     # forecast acc
    )

    out_p = pl.pallas_call(
        nbeats_kernel,
        out_shape=jax.ShapeDtypeStruct((Bp, Fp), x.dtype),
        grid_spec=grid_spec,
        compiler_params=pltpu.CompilerParams(
            dimension_semantics=("parallel", "arbitrary"),
            vmem_limit_bytes=vmem_limit),
    )(xr_p, mr_p, params["w1"], params["b12"], params["w2"],
      params["wt"], params["bt"])

    return out_p[:B, :F]


def nbeats_reference(x, input_mask, w1, b1, w2, b2, wt, bt):
    """Pure-JAX reference mirroring the PyTorch forward."""
    B, L = x.shape
    NB = w1.shape[0]
    resid = jnp.flip(x, axis=1)
    m = jnp.flip(input_mask, axis=1)
    forecast = x[:, -1:]
    for i in range(NB):
        h = jax.nn.relu(resid @ w1[i] + b1[i, 0])
        h = jax.nn.relu(h @ w2[i] + b2[i, 0])
        theta = h @ wt[i] + bt[i, 0]
        backcast = theta[:, :L]
        block_forecast = theta[:, L:]
        resid = (resid - backcast) * m
        forecast = forecast + block_forecast
    return forecast


if __name__ == "__main__":
    B, L, F, H, NB = 8, 16, 8, 32, 3

    key = jax.random.PRNGKey(0)
    kx, km, k1, k2, k3, k4, k5, k6 = jax.random.split(key, 8)

    x = jax.random.normal(kx, (B, L), dtype=jnp.float32)
    input_mask = (jax.random.uniform(km, (B, L)) > 0.2).astype(jnp.float32)

    scale = 0.1
    w1 = scale * jax.random.normal(k1, (NB, L, H), dtype=jnp.float32)
    b1 = scale * jax.random.normal(k2, (NB, 1, H), dtype=jnp.float32)
    w2 = scale * jax.random.normal(k3, (NB, H, H), dtype=jnp.float32)
    b2 = scale * jax.random.normal(k4, (NB, 1, H), dtype=jnp.float32)
    wt = scale * jax.random.normal(k5, (NB, H, L + F), dtype=jnp.float32)
    bt = scale * jax.random.normal(k6, (NB, 1, L + F), dtype=jnp.float32)

    ref = nbeats_reference(x, input_mask, w1, b1, w2, b2, wt, bt)

    # f32 weights: tight check against the pure-JAX reference.
    params_f32 = prepare_nbeats_params(w1, b1, w2, b2, wt, bt,
                                       weight_dtype=jnp.float32)
    out = jax.block_until_ready(nbeats_forward(x, input_mask, params_f32))
    assert out.shape == (B, F), out.shape
    assert jnp.allclose(out, ref, atol=1e-4, rtol=1e-4), (
        float(jnp.max(jnp.abs(out - ref))))

    # bf16 weights (production setting): half VMEM/HBM traffic, f32 accumulate.
    params_bf16 = prepare_nbeats_params(w1, b1, w2, b2, wt, bt,
                                        weight_dtype=jnp.bfloat16)
    out_bf16 = jax.block_until_ready(nbeats_forward(x, input_mask, params_bf16))
    assert out_bf16.shape == (B, F), out_bf16.shape
    assert jnp.allclose(out_bf16, ref, atol=5e-2, rtol=5e-2), (
        float(jnp.max(jnp.abs(out_bf16 - ref))))

    print("KERNEL_OK")
</pallas_src>

<mosaic_0001>
module attributes {stable_mosaic.version = 11 : i64} {
  func.func @nbeats_kernel(%arg0: i32, %arg1: i32, %arg2: memref<8x128xf32, #tpu.memory_space<vmem>>, %arg3: memref<8x128xf32, #tpu.memory_space<vmem>>, %arg4: memref<1x128x128xf32, #tpu.memory_space<vmem>>, %arg5: memref<1x2x128xf32, #tpu.memory_space<vmem>>, %arg6: memref<1x128x128xf32, #tpu.memory_space<vmem>>, %arg7: memref<1x128x256xf32, #tpu.memory_space<vmem>>, %arg8: memref<1x1x256xf32, #tpu.memory_space<vmem>>, %arg9: memref<8x128xf32, #tpu.memory_space<vmem>>, %arg10: memref<8x128xf32, #tpu.memory_space<vmem>>, %arg11: memref<8x128xf32, #tpu.memory_space<vmem>>) attributes {dimension_semantics = [#tpu.dimension_semantics<parallel>, #tpu.dimension_semantics<arbitrary>], iteration_bounds = array<i64: 1, 3>, scalar_prefetch = 0 : i64, scratch_operands = 2 : i64, tpu.core_type = #tpu.core_type<tc>, window_params = [{transform_indices = @transform_0, window_bounds = array<i64: 8, 128>}, {transform_indices = @transform_1, window_bounds = array<i64: 8, 128>}, {transform_indices = @transform_2, window_bounds = array<i64: 1, 128, 128>}, {transform_indices = @transform_3, window_bounds = array<i64: 1, 2, 128>}, {transform_indices = @transform_4, window_bounds = array<i64: 1, 128, 128>}, {transform_indices = @transform_5, window_bounds = array<i64: 1, 128, 256>}, {transform_indices = @transform_6, window_bounds = array<i64: 1, 1, 256>}, {transform_indices = @transform_7, window_bounds = array<i64: 8, 128>}]} {
    %c0_i32 = arith.constant 0 : i32
    %0 = arith.cmpi eq, %arg1, %c0_i32 : i32
    %1 = arith.extui %0 : i1 to i32
    %c0_i32_0 = arith.constant 0 : i32
    %2 = arith.cmpi ne, %1, %c0_i32_0 : i32
    scf.if %2 {
      %c0_32 = arith.constant 0 : index
      %c0_33 = arith.constant 0 : index
      %41 = vector.load %arg2[%c0_32, %c0_33] : memref<8x128xf32, #tpu.memory_space<vmem>>, vector<8x128xf32>
      %c0_34 = arith.constant 0 : index
      %c0_35 = arith.constant 0 : index
      %42 = vector.load %arg10[%c0_34, %c0_35] : memref<8x128xf32, #tpu.memory_space<vmem>>, vector<8x128xf32>
      tpu.vector_store %arg10[%c0_34, %c0_35], %41 {strides = array<i32>} : memref<8x128xf32, #tpu.memory_space<vmem>>, vector<8x128xf32>,
      %c0_36 = arith.constant 0 : index
      %c0_37 = arith.constant 0 : index
      %43 = vector.load %arg2[%c0_36, %c0_37] : memref<8x128xf32, #tpu.memory_space<vmem>>, vector<8x1xf32>
      %44 = vector.shape_cast %43 : vector<8x1xf32> to vector<8x1xf32>
      %45 = vector.broadcast %44 : vector<8x1xf32> to vector<8x128xf32>
      %c0_38 = arith.constant 0 : index
      %c0_39 = arith.constant 0 : index
      %46 = vector.load %arg11[%c0_38, %c0_39] : memref<8x128xf32, #tpu.memory_space<vmem>>, vector<8x128xf32>
      tpu.vector_store %arg11[%c0_38, %c0_39], %45 {strides = array<i32>} : memref<8x128xf32, #tpu.memory_space<vmem>>, vector<8x128xf32>,
    } else {
    }
    %c0 = arith.constant 0 : index
    %c0_1 = arith.constant 0 : index
    %3 = vector.load %arg10[%c0, %c0_1] : memref<8x128xf32, #tpu.memory_space<vmem>>, vector<8x128xf32>
    %c0_2 = arith.constant 0 : index
    %c0_3 = arith.constant 0 : index
    %c0_4 = arith.constant 0 : index
    %4 = vector.load %arg4[%c0_2, %c0_3, %c0_4] : memref<1x128x128xf32, #tpu.memory_space<vmem>>, vector<1x128x128xf32>
    %5 = vector.shape_cast %4 : vector<1x128x128xf32> to vector<128x128xf32>
    %cst = arith.constant dense<0.000000e+00> : vector<8x128xf32>
    %6 = tpu.matmul %3, %5, %cst {dimension_numbers = #tpu.dot_dimension_numbers<[1], [0], [0], [1], [0, 0, 1, 1], [], []>} : vector<8x128xf32>, vector<128x128xf32>, vector<8x128xf32> -> vector<8x128xf32>
    %c0_5 = arith.constant 0 : index
    %c0_6 = arith.constant 0 : index
    %c0_7 = arith.constant 0 : index
    %7 = vector.load %arg5[%c0_5, %c0_6, %c0_7] : memref<1x2x128xf32, #tpu.memory_space<vmem>>, vector<1x1x128xf32>
    %8 = vector.shape_cast %7 : vector<1x1x128xf32> to vector<1x128xf32>
    %9 = vector.broadcast %8 : vector<1x128xf32> to vector<8x128xf32>
    %10 = arith.addf %6, %9 : vector<8x128xf32>
    %cst_8 = arith.constant 0.000000e+00 : f32
    %11 = vector.broadcast %cst_8 : f32 to vector<8x128xf32>
    %12 = arith.maximumf %10, %11 : vector<8x128xf32>
    %c0_9 = arith.constant 0 : index
    %c0_10 = arith.constant 0 : index
    %c0_11 = arith.constant 0 : index
    %13 = vector.load %arg6[%c0_9, %c0_10, %c0_11] : memref<1x128x128xf32, #tpu.memory_space<vmem>>, vector<1x128x128xf32>
    %14 = vector.shape_cast %13 : vector<1x128x128xf32> to vector<128x128xf32>
    %cst_12 = arith.constant dense<0.000000e+00> : vector<8x128xf32>
    %15 = tpu.matmul %12, %14, %cst_12 {dimension_numbers = #tpu.dot_dimension_numbers<[1], [0], [0], [1], [0, 0, 1, 1], [], []>} : vector<8x128xf32>, vector<128x128xf32>, vector<8x128xf32> -> vector<8x128xf32>
    %c0_13 = arith.constant 0 : index
    %c1 = arith.constant 1 : index
    %c0_14 = arith.constant 0 : index
    %16 = vector.load %arg5[%c0_13, %c1, %c0_14] : memref<1x2x128xf32, #tpu.memory_space<vmem>>, vector<1x1x128xf32>
    %17 = vector.shape_cast %16 : vector<1x1x128xf32> to vector<1x128xf32>
    %18 = vector.broadcast %17 : vector<1x128xf32> to vector<8x128xf32>
    %19 = arith.addf %15, %18 : vector<8x128xf32>
    %cst_15 = arith.constant 0.000000e+00 : f32
    %20 = vector.broadcast %cst_15 : f32 to vector<8x128xf32>
    %21 = arith.maximumf %19, %20 : vector<8x128xf32>
    %c0_16 = arith.constant 0 : index
    %c0_17 = arith.constant 0 : index
    %c0_18 = arith.constant 0 : index
    %22 = vector.load %arg7[%c0_16, %c0_17, %c0_18] : memref<1x128x256xf32, #tpu.memory_space<vmem>>, vector<1x128x256xf32>
    %23 = vector.shape_cast %22 : vector<1x128x256xf32> to vector<128x256xf32>
    %cst_19 = arith.constant dense<0.000000e+00> : vector<8x256xf32>
    %24 = tpu.matmul %21, %23, %cst_19 {dimension_numbers = #tpu.dot_dimension_numbers<[1], [0], [0], [1], [0, 0, 1, 1], [], []>} : vector<8x128xf32>, vector<128x256xf32>, vector<8x256xf32> -> vector<8x256xf32>
    %c0_20 = arith.constant 0 : index
    %c0_21 = arith.constant 0 : index
    %c0_22 = arith.constant 0 : index
    %25 = vector.load %arg8[%c0_20, %c0_21, %c0_22] : memref<1x1x256xf32, #tpu.memory_space<vmem>>, vector<1x1x256xf32>
    %26 = vector.shape_cast %25 : vector<1x1x256xf32> to vector<1x256xf32>
    %27 = vector.broadcast %26 : vector<1x256xf32> to vector<8x256xf32>
    %28 = arith.addf %24, %27 : vector<8x256xf32>
    %29 = vector.extract_strided_slice %28 {offsets = [0, 0], sizes = [8, 128], strides = [1, 1]} : vector<8x256xf32> to vector<8x128xf32>
    %30 = vector.extract_strided_slice %28 {offsets = [0, 128], sizes = [8, 128], strides = [1, 1]} : vector<8x256xf32> to vector<8x128xf32>
    %31 = arith.subf %3, %29 : vector<8x128xf32>
    %c0_23 = arith.constant 0 : index
    %c0_24 = arith.constant 0 : index
    %32 = vector.load %arg3[%c0_23, %c0_24] : memref<8x128xf32, #tpu.memory_space<vmem>>, vector<8x128xf32>
    %33 = arith.mulf %31, %32 : vector<8x128xf32>
    %c0_25 = arith.constant 0 : index
    %c0_26 = arith.constant 0 : index
    %34 = vector.load %arg10[%c0_25, %c0_26] : memref<8x128xf32, #tpu.memory_space<vmem>>, vector<8x128xf32>
    tpu.vector_store %arg10[%c0_25, %c0_26], %33 {strides = array<i32>} : memref<8x128xf32, #tpu.memory_space<vmem>>, vector<8x128xf32>,
    %c0_27 = arith.constant 0 : index
    %c0_28 = arith.constant 0 : index
    %35 = vector.load %arg11[%c0_27, %c0_28] : memref<8x128xf32, #tpu.memory_space<vmem>>, vector<8x128xf32>
    %36 = arith.addf %35, %30 : vector<8x128xf32>
    %c0_29 = arith.constant 0 : index
    %c0_30 = arith.constant 0 : index
    %37 = vector.load %arg11[%c0_29, %c0_30] : memref<8x128xf32, #tpu.memory_space<vmem>>, vector<8x128xf32>
    tpu.vector_store %arg11[%c0_29, %c0_30], %36 {strides = array<i32>} : memref<8x128xf32, #tpu.memory_space<vmem>>, vector<8x128xf32>,
    %c2_i32 = arith.constant 2 : i32
    %38 = arith.cmpi eq, %arg1, %c2_i32 : i32
    %39 = arith.extui %38 : i1 to i32
    %c0_i32_31 = arith.constant 0 : i32
    %40 = arith.cmpi ne, %39, %c0_i32_31 : i32
    scf.if %40 {
      %c0_32 = arith.constant 0 : index
      %c0_33 = arith.constant 0 : index
      %41 = vector.load %arg11[%c0_32, %c0_33] : memref<8x128xf32, #tpu.memory_space<vmem>>, vector<8x128xf32>
      %c0_34 = arith.constant 0 : index
      %c0_35 = arith.constant 0 : index
      %42 = vector.load %arg9[%c0_34, %c0_35] : memref<8x128xf32, #tpu.memory_space<vmem>>, vector<8x128xf32>
      tpu.vector_store %arg9[%c0_34, %c0_35], %41 {strides = array<i32>} : memref<8x128xf32, #tpu.memory_space<vmem>>, vector<8x128xf32>,
    } else {
    }
    return
  }
  func.func @transform_0(%arg0: i32, %arg1: i32) -> (i32, i32) {
    %c0_i32 = arith.constant 0 : i32
    %c0_i32_0 = arith.constant 0 : i32
    return %arg0, %c0_i32 : i32, i32
  }
  func.func @transform_1(%arg0: i32, %arg1: i32) -> (i32, i32) {
    %c0_i32 = arith.constant 0 : i32
    %c0_i32_0 = arith.constant 0 : i32
    return %arg0, %c0_i32 : i32, i32
  }
  func.func @transform_2(%arg0: i32, %arg1: i32) -> (i32, i32, i32) {
    %c0_i32 = arith.constant 0 : i32
    %c0_i32_0 = arith.constant 0 : i32
    %c0_i32_1 = arith.constant 0 : i32
    return %arg1, %c0_i32, %c0_i32_0 : i32, i32, i32
  }
  func.func @transform_3(%arg0: i32, %arg1: i32) -> (i32, i32, i32) {
    %c0_i32 = arith.constant 0 : i32
    %c0_i32_0 = arith.constant 0 : i32
    %c0_i32_1 = arith.constant 0 : i32
    return %arg1, %c0_i32, %c0_i32_0 : i32, i32, i32
  }
  func.func @transform_4(%arg0: i32, %arg1: i32) -> (i32, i32, i32) {
    %c0_i32 = arith.constant 0 : i32
    %c0_i32_0 = arith.constant 0 : i32
    %c0_i32_1 = arith.constant 0 : i32
    return %arg1, %c0_i32, %c0_i32_0 : i32, i32, i32
  }
  func.func @transform_5(%arg0: i32, %arg1: i32) -> (i32, i32, i32) {
    %c0_i32 = arith.constant 0 : i32
    %c0_i32_0 = arith.constant 0 : i32
    %c0_i32_1 = arith.constant 0 : i32
    return %arg1, %c0_i32, %c0_i32_0 : i32, i32, i32
  }
  func.func @transform_6(%arg0: i32, %arg1: i32) -> (i32, i32, i32) {
    %c0_i32 = arith.constant 0 : i32
    %c0_i32_0 = arith.constant 0 : i32
    %c0_i32_1 = arith.constant 0 : i32
    return %arg1, %c0_i32, %c0_i32_0 : i32, i32, i32
  }
  func.func @transform_7(%arg0: i32, %arg1: i32) -> (i32, i32) {
    %c0_i32 = arith.constant 0 : i32
    %c0_i32_0 = arith.constant 0 : i32
    return %arg0, %c0_i32 : i32, i32
  }
}

</mosaic_0001>

<llo_original>
// kernel: tpu_custom_call.1
$region0: #{tpu_custom_call.1}
  #allocation0 [shape = 'u32[]', space=smem, size = 0x4, offset = 0x4, fixed_abs, tag = 'smem constant byte address 0x4 - core index']
  #allocation1 [shape = 'u32[144,128]{1,0:T(1,128)}', space=vmem, size = 0x12000, scoped, tag = 'internal scratch']
  #allocation2 [shape = 'f32[8,128]{1,0:T(8,128)}', space=vmem, size = 0x1000, scoped, tag = 'scratch operand']
  #allocation3 [shape = 'f32[8,128]{1,0:T(8,128)}', space=vmem, size = 0x1000, scoped, tag = 'scratch operand']
  %s0 = inlined_call_operand.hbm [shape: f32[8,128], index: 0, kind: input, shape index: {}]
  %s1 = inlined_call_operand.hbm [shape: f32[8,128], index: 1, kind: input, shape index: {}]
  %s2 = inlined_call_operand.hbm [shape: f32[3,128,128], index: 2, kind: input, shape index: {}]
  %s3 = inlined_call_operand.vmem [shape: f32[3,2,128], index: 3, kind: input, shape index: {}]
  %s4 = inlined_call_operand.hbm [shape: f32[3,128,128], index: 4, kind: input, shape index: {}]
  %s5 = inlined_call_operand.hbm [shape: f32[3,128,256], index: 5, kind: input, shape index: {}]
  %s6 = inlined_call_operand.vmem [shape: f32[3,1,256], index: 6, kind: input, shape index: {}]
  %s7 = inlined_call_operand.hbm [shape: f32[8,128], index: 7, kind: output, shape index: {}]
  %s8 = sld [smem:[#allocation0]]
  $region89: #{tpu_custom_call.1} parent=0
    _
  %s10 = ssub.s32 1, %s8
  %s11 = scalar_select 0, %s10, %s8
  $region1: #{tpu_custom_call.1} parent=0
    #allocation4 [shape = 'u8[4096]{0}', space=vmem, size = 0x1000, scoped, tag = 'input window, operand 0, single buffered']
    #allocation5 [shape = 's32[2]{0}', space=sflag, size = 0x8, scoped, tag = 'scoped memory for tpu_custom_call.1']
    #allocation6 [shape = 's32[2]{0}', space=sflag, size = 0x8, scoped, tag = 'scoped memory for tpu_custom_call.1']
    #allocation7 [shape = 'u8[4096]{0}', space=vmem, size = 0x1000, scoped, tag = 'input window, operand 1, single buffered']
    #allocation8 [shape = 's32[1]{0}', space=sflag, size = 0x4, scoped, tag = 'scoped memory for tpu_custom_call.1']
    #allocation9 [shape = 'u8[131072]{0}', space=vmem, size = 0x20000, scoped, tag = 'input window, operand 2']
    #allocation10 [shape = 'u8[131072]{0}', space=vmem, size = 0x20000, scoped, tag = 'input window, operand 4']
    #allocation11 [shape = 'u8[262144]{0}', space=vmem, size = 0x40000, scoped, tag = 'input window, operand 5']
    #allocation12 [shape = 'u8[4096]{0}', space=vmem, size = 0x1000, scoped, tag = 'output window, operand 0, single buffered']
    %12 = vsyncpa [#allocation5], 0
    %13 = vsyncpa [#allocation8], 0
    %14 = vsyncpa [#allocation6], 0
    loop: start=0, step=1, limit=5
    $region2: #{tpu_custom_call.1} parent=1 // loop_pre_header
      _
    $region3: #{tpu_custom_call.1} parent=1 // loop_header
      %s16 = sphi 0, %s20
      %p17 = scmp.ge.s32.totalorder %s16, 5
      %s23 = sphi 0, %s35
      %s24 = sphi 0, %s31
      %s25 = sphi 0, %s23
      %s26 = sphi 0, %s24
      %s27 = sphi 0, %s25
      %s28 = sphi 0, %s26
      %s38 = sphi 0, %s40
      %s41 = sphi 0, %s38
      %s42 = sphi 0, %s41
      %s58 = sphi 0, %s42
      %s64 = sphi 0, %s66
      %s67 = sphi 0, %s64
      %s68 = sphi 0, %s67
      %s84 = sphi 0, %s68
      %s90 = sphi 0, %s92
      %s93 = sphi 0, %s90
      %s94 = sphi 0, %s93
      %s110 = sphi 0, %s94
      %s116 = sphi 0, %s118
      %s119 = sphi 0, %s116
      %s120 = sphi 0, %s119
      %s136 = sphi 0, %s120
      %s142 = sphi 0, %s144
      %s145 = sphi 0, %s142
      %s146 = sphi 0, %s145
      %s162 = sphi 0, %s146
      %s168 = sphi 0, %s170
      %s171 = sphi 0, %s168
      %s172 = sphi 0, %s171
      %s188 = sphi 0, %s172
      %s194 = sphi 0, %s196
      %s197 = sphi 0, %s194
      %s198 = sphi 0, %s197
      %s214 = sphi 0, %s198
      %s220 = sphi 0, %s222
      %s223 = sphi 0, %s220
      %s224 = sphi 0, %s223
      %s240 = sphi 0, %s224
    $region4: #{tpu_custom_call.1} parent=1 // loop_header_branch
      %19 = sbr.rel (%p17) target = $region8
    $region5: #{tpu_custom_call.1} parent=1 // loop_body
      %s21 = ssub.s32 %s16, 1
      %s22 = ssub.s32 %s16, 2
      %s29 = sadd.s32 1, %s24
      %p30 = scmp.ge.s32.totalorder %s29, 3
      %s31 = scalar_select %p30, 0, %s29
      %s32 = sadd.s32 1, %s23
      %s33 = scalar_select %p30, %s32, %s23
      %p34 = scmp.ge.s32.totalorder %s33, 1
      %s35 = scalar_select %p34, 0, %s33
      %s36 = ssub.s32 %s23, %s35
      %p37 = scmp.eq.s32.totalorder %s36, 0
      %s39 = sadd.s32 %s38, 1
      %s40 = scalar_select %p37, %s38, %s39
      %p43 = pneg %p37
      %p44 = scmp.eq.s32.totalorder %s16, 2
      %p45 = por %p43, %p44
      %p46 = scmp.ne.s32.totalorder %s38, %s41
      %p47 = scmp.eq.s32.totalorder %s16, 0
      %p48 = por %p46, %p47
      %p49 = scmp.ne.s32.totalorder %s38, %s41
      %p50 = scmp.eq.s32.totalorder %s21, 2
      %p51 = por %p49, %p50
      %p52 = scmp.ne.s32.totalorder %s41, %s42
      %p53 = scmp.eq.s32.totalorder %s21, 0
      %p54 = por %p52, %p53
      %p55 = scmp.ne.s32.totalorder %s41, %s42
      %p56 = scmp.eq.s32.totalorder %s22, 2
      %p57 = por %p55, %p56
      %p59 = scmp.ne.s32.totalorder %s42, %s58
      %p60 = scmp.eq.s32.totalorder %s22, 0
      %p61 = por %p59, %p60
      %s62 = ssub.s32 %s23, %s35
      %p63 = scmp.eq.s32.totalorder %s62, 0
      %s65 = sadd.s32 %s64, 1
      %s66 = scalar_select %p63, %s64, %s65
      %p69 = pneg %p63
      %p70 = scmp.eq.s32.totalorder %s16, 2
      %p71 = por %p69, %p70
      %p72 = scmp.ne.s32.totalorder %s64, %s67
      %p73 = scmp.eq.s32.totalorder %s16, 0
      %p74 = por %p72, %p73
      %p75 = scmp.ne.s32.totalorder %s64, %s67
      %p76 = scmp.eq.s32.totalorder %s21, 2
      %p77 = por %p75, %p76
      %p78 = scmp.ne.s32.totalorder %s67, %s68
      %p79 = scmp.eq.s32.totalorder %s21, 0
      %p80 = por %p78, %p79
      %p81 = scmp.ne.s32.totalorder %s67, %s68
      %p82 = scmp.eq.s32.totalorder %s22, 2
      %p83 = por %p81, %p82
      %p85 = scmp.ne.s32.totalorder %s68, %s84
      %p86 = scmp.eq.s32.totalorder %s22, 0
      %p87 = por %p85, %p86
      %s88 = ssub.s32 %s24, %s31
      %p89 = scmp.eq.s32.totalorder %s88, 0
      %s91 = sadd.s32 %s90, 1
      %s92 = scalar_select %p89, %s90, %s91
      %p95 = pneg %p89
      %p96 = scmp.eq.s32.totalorder %s16, 2
      %p97 = por %p95, %p96
      %p98 = scmp.ne.s32.totalorder %s90, %s93
      %p99 = scmp.eq.s32.totalorder %s16, 0
      %p100 = por %p98, %p99
      %p101 = scmp.ne.s32.totalorder %s90, %s93
      %p102 = scmp.eq.s32.totalorder %s21, 2
      %p103 = por %p101, %p102
      %p104 = scmp.ne.s32.totalorder %s93, %s94
      %p105 = scmp.eq.s32.totalorder %s21, 0
      %p106 = por %p104, %p105
      %p107 = scmp.ne.s32.totalorder %s93, %s94
      %p108 = scmp.eq.s32.totalorder %s22, 2
      %p109 = por %p107, %p108
      %p111 = scmp.ne.s32.totalorder %s94, %s110
      %p112 = scmp.eq.s32.totalorder %s22, 0
      %p113 = por %p111, %p112
      %s114 = ssub.s32 %s24, %s31
      %p115 = scmp.eq.s32.totalorder %s114, 0
      %s117 = sadd.s32 %s116, 1
      %s118 = scalar_select %p115, %s116, %s117
      %p121 = pneg %p115
      %p122 = scmp.eq.s32.totalorder %s16, 2
      %p123 = por %p121, %p122
      %p124 = scmp.ne.s32.totalorder %s116, %s119
      %p125 = scmp.eq.s32.totalorder %s16, 0
      %p126 = por %p124, %p125
      %p127 = scmp.ne.s32.totalorder %s116, %s119
      %p128 = scmp.eq.s32.totalorder %s21, 2
      %p129 = por %p127, %p128
      %p130 = scmp.ne.s32.totalorder %s119, %s120
      %p131 = scmp.eq.s32.totalorder %s21, 0
      %p132 = por %p130, %p131
      %p133 = scmp.ne.s32.totalorder %s119, %s120
      %p134 = scmp.eq.s32.totalorder %s22, 2
      %p135 = por %p133, %p134
      %p137 = scmp.ne.s32.totalorder %s120, %s136
      %p138 = scmp.eq.s32.totalorder %s22, 0
      %p139 = por %p137, %p138
      %s140 = ssub.s32 %s24, %s31
      %p141 = scmp.eq.s32.totalorder %s140, 0
      %s143 = sadd.s32 %s142, 1
      %s144 = scalar_select %p141, %s142, %s143
      %p147 = pneg %p141
      %p148 = scmp.eq.s32.totalorder %s16, 2
      %p149 = por %p147, %p148
      %p150 = scmp.ne.s32.totalorder %s142, %s145
      %p151 = scmp.eq.s32.totalorder %s16, 0
      %p152 = por %p150, %p151
      %p153 = scmp.ne.s32.totalorder %s142, %s145
      %p154 = scmp.eq.s32.totalorder %s21, 2
      %p155 = por %p153, %p154
      %p156 = scmp.ne.s32.totalorder %s145, %s146
      %p157 = scmp.eq.s32.totalorder %s21, 0
      %p158 = por %p156, %p157
      %p159 = scmp.ne.s32.totalorder %s145, %s146
      %p160 = scmp.eq.s32.totalorder %s22, 2
      %p161 = por %p159, %p160
      %p163 = scmp.ne.s32.totalorder %s146, %s162
      %p164 = scmp.eq.s32.totalorder %s22, 0
      %p165 = por %p163, %p164
      %s166 = ssub.s32 %s24, %s31
      %p167 = scmp.eq.s32.totalorder %s166, 0
      %s169 = sadd.s32 %s168, 1
      %s170 = scalar_select %p167, %s168, %s169
      %p173 = pneg %p167
      %p174 = scmp.eq.s32.totalorder %s16, 2
      %p175 = por %p173, %p174
      %p176 = scmp.ne.s32.totalorder %s168, %s171
      %p177 = scmp.eq.s32.totalorder %s16, 0
      %p178 = por %p176, %p177
      %p179 = scmp.ne.s32.totalorder %s168, %s171
      %p180 = scmp.eq.s32.totalorder %s21, 2
      %p181 = por %p179, %p180
      %p182 = scmp.ne.s32.totalorder %s171, %s172
      %p183 = scmp.eq.s32.totalorder %s21, 0
      %p184 = por %p182, %p183
      %p185 = scmp.ne.s32.totalorder %s171, %s172
      %p186 = scmp.eq.s32.totalorder %s22, 2
      %p187 = por %p185, %p186
      %p189 = scmp.ne.s32.totalorder %s172, %s188
      %p190 = scmp.eq.s32.totalorder %s22, 0
      %p191 = por %p189, %p190
      %s192 = ssub.s32 %s24, %s31
      %p193 = scmp.eq.s32.totalorder %s192, 0
      %s195 = sadd.s32 %s194, 1
      %s196 = scalar_select %p193, %s194, %s195
      %p199 = pneg %p193
      %p200 = scmp.eq.s32.totalorder %s16, 2
      %p201 = por %p199, %p200
      %p202 = scmp.ne.s32.totalorder %s194, %s197
      %p203 = scmp.eq.s32.totalorder %s16, 0
      %p204 = por %p202, %p203
      %p205 = scmp.ne.s32.totalorder %s194, %s197
      %p206 = scmp.eq.s32.totalorder %s21, 2
      %p207 = por %p205, %p206
      %p208 = scmp.ne.s32.totalorder %s197, %s198
      %p209 = scmp.eq.s32.totalorder %s21, 0
      %p210 = por %p208, %p209
      %p211 = scmp.ne.s32.totalorder %s197, %s198
      %p212 = scmp.eq.s32.totalorder %s22, 2
      %p213 = por %p211, %p212
      %p215 = scmp.ne.s32.totalorder %s198, %s214
      %p216 = scmp.eq.s32.totalorder %s22, 0
      %p217 = por %p215, %p216
      %s218 = ssub.s32 %s23, %s35
      %p219 = scmp.eq.s32.totalorder %s218, 0
      %s221 = sadd.s32 %s220, 1
      %s222 = scalar_select %p219, %s220, %s221
      %p225 = pneg %p219
      %p226 = scmp.eq.s32.totalorder %s16, 2
      %p227 = por %p225, %p226
      %p228 = scmp.ne.s32.totalorder %s220, %s223
      %p229 = scmp.eq.s32.totalorder %s16, 0
      %p230 = por %p228, %p229
      %p231 = scmp.ne.s32.totalorder %s220, %s223
      %p232 = scmp.eq.s32.totalorder %s21, 2
      %p233 = por %p231, %p232
      %p234 = scmp.ne.s32.totalorder %s223, %s224
      %p235 = scmp.eq.s32.totalorder %s21, 0
      %p236 = por %p234, %p235
      %p237 = scmp.ne.s32.totalorder %s223, %s224
      %p238 = scmp.eq.s32.totalorder %s22, 2
      %p239 = por %p237, %p238
      %p241 = scmp.ne.s32.totalorder %s224, %s240
      %p242 = scmp.eq.s32.totalorder %s22, 0
      %p243 = por %p241, %p242
      %p244 = scmp.le.s32.totalorder 1, %s16
      %p245 = scmp.lt.s32.totalorder %s16, 4
      %p246 = pnand %p244, %p245
      %p247 = pneg %p246
      // Predicated region
      $region9: #{tpu_custom_call.1} parent=5 // pred_check
        _
      $region10: #{tpu_custom_call.1} parent=5 // pred_check_branch
        %249 = sbr.rel (%p246) target = $region12
      $region11: #{tpu_custom_call.1} parent=5 // pred_region
        %s250 = ssub.s32 %s16, 1
        // Predicated region
        $region13: #{tpu_custom_call.1} parent=11 // pred_check
          %p251 = pneg %p54
        $region14: #{tpu_custom_call.1} parent=11 // pred_check_branch
          %253 = sbr.rel (%p251) target = $region16
        $region15: #{tpu_custom_call.1} parent=11 // pred_region
          %s255 = ssub.s32 128, 128
          %256 = vsyncadd [#allocation5], %s255
          %s257 = smul.addr %s25, 128
          %s258 = scalar_lea.hbm %s0, %s257
          %s260 = sshll.u32 [#allocation4], 4
          %s261 = int_to_ptr.vmem [resolvable:$true] %s260
          %263 = dma.hbm_to_vmem [thread:$0]  %s258, 128, %s261, [#allocation5]
        $region16: #{tpu_custom_call.1} parent=11 // pred_fallthru
          _
        // Predicated region
        $region17: #{tpu_custom_call.1} parent=11 // pred_check
          %p264 = pneg %p80
        $region18: #{tpu_custom_call.1} parent=11 // pred_check_branch
          %266 = sbr.rel (%p264) target = $region20
        $region19: #{tpu_custom_call.1} parent=11 // pred_region
          %s268 = ssub.s32 128, 128
          %269 = vsyncadd [#allocation8], %s268
          %s270 = smul.addr %s25, 128
          %s271 = scalar_lea.hbm %s1, %s270
          %s273 = sshll.u32 [#allocation7], 4
          %s274 = int_to_ptr.vmem [resolvable:$true] %s273
          %276 = dma.hbm_to_vmem [thread:$0]  %s271, 128, %s274, [#allocation8]
        $region20: #{tpu_custom_call.1} parent=11 // pred_fallthru
          _
      $region12: #{tpu_custom_call.1} parent=5 // pred_fallthru
        _
      %p277 = scmp.lt.s32.totalorder %s16, 3
      // Predicated region
      $region21: #{tpu_custom_call.1} parent=5 // pred_check
        %p278 = pneg %p277
      $region22: #{tpu_custom_call.1} parent=5 // pred_check_branch
        %280 = sbr.rel (%p278) target = $region24
      $region23: #{tpu_custom_call.1} parent=5 // pred_region
        // Predicated region
        $region25: #{tpu_custom_call.1} parent=23 // pred_check
          %p281 = pneg %p100
        $region26: #{tpu_custom_call.1} parent=23 // pred_check_branch
          %283 = sbr.rel (%p281) target = $region28
        $region27: #{tpu_custom_call.1} parent=23 // pred_region
          %s284 = sand.u32 %s16, 1
          %s285 = scalar_lea.sflag [#allocation5], %s284
          %s286 = sand.u32 %s90, 1
          %s287 = smul.addr %s286, 128
          %s288 = scalar_lea.vmem [#allocation9], %s287
          %s290 = ssub.s32 2048, 2048
          %291 = vsyncadd %s285, %s290
          %s292 = smul.addr %s24, 16
          %s293 = smul.addr %s292, 128
          %s294 = scalar_lea.hbm %s2, %s293
          %s295 = sshll.u32 %s288, 4
          %s296 = int_to_ptr.vmem [resolvable:$true] %s295
          %301 = dma.hbm_to_vmem [thread:$0]  %s294, 2048, %s296, %s285, 128, 128, 8
        $region28: #{tpu_custom_call.1} parent=23 // pred_fallthru
          _
        // Predicated region
        $region29: #{tpu_custom_call.1} parent=23 // pred_check
          %p302 = pneg %p126
        $region30: #{tpu_custom_call.1} parent=23 // pred_check_branch
          %304 = sbr.rel (%p302) target = $region32
        $region31: #{tpu_custom_call.1} parent=23 // pred_region
          %p305 = scmp.lt.s32.totalorder %s24, 2
          %s306 = scalar_select %p305, %s24, 2
          %s307 = smul.addr %s306, 2
          %s308 = scalar_lea.vmem %s3, %s307
        $region32: #{tpu_custom_call.1} parent=23 // pred_fallthru
          _
        // Predicated region
        $region33: #{tpu_custom_call.1} parent=23 // pred_check
          %p309 = pneg %p152
        $region34: #{tpu_custom_call.1} parent=23 // pred_check_branch
          %311 = sbr.rel (%p309) target = $region36
        $region35: #{tpu_custom_call.1} parent=23 // pred_region
          %s312 = sand.u32 %s16, 1
          %s313 = scalar_lea.sflag [#allocation5], %s312
          %s314 = sand.u32 %s142, 1
          %s315 = smul.addr %s314, 128
          %s316 = scalar_lea.vmem [#allocation10], %s315
          %s318 = ssub.s32 2048, 2048
          %319 = vsyncadd %s313, %s318
          %s320 = smul.addr %s24, 16
          %s321 = smul.addr %s320, 128
          %s322 = scalar_lea.hbm %s4, %s321
          %s323 = sshll.u32 %s316, 4
          %s324 = int_to_ptr.vmem [resolvable:$true] %s323
          %329 = dma.hbm_to_vmem [thread:$0]  %s322, 2048, %s324, %s313, 128, 128, 8
        $region36: #{tpu_custom_call.1} parent=23 // pred_fallthru
          _
        // Predicated region
        $region37: #{tpu_custom_call.1} parent=23 // pred_check
          %p330 = pneg %p178
        $region38: #{tpu_custom_call.1} parent=23 // pred_check_branch
          %332 = sbr.rel (%p330) target = $region40
        $region39: #{tpu_custom_call.1} parent=23 // pred_region
          %s333 = sand.u32 %s16, 1
          %s334 = scalar_lea.sflag [#allocation5], %s333
          %s335 = sand.u32 %s168, 1
          %s336 = smul.addr %s335, 256
          %s337 = scalar_lea.vmem [#allocation11], %s336
          %s339 = ssub.s32 4096, 4096
          %340 = vsyncadd %s334, %s339
          %s341 = smul.addr %s24, 32
          %s342 = smul.addr %s341, 128
          %s343 = scalar_lea.hbm %s5, %s342
          %s344 = sshll.u32 %s337, 4
          %s345 = int_to_ptr.vmem [resolvable:$true] %s344
          %350 = dma.hbm_to_vmem [thread:$0]  %s343, 4096, %s345, %s334, 256, 256, 16
        $region40: #{tpu_custom_call.1} parent=23 // pred_fallthru
          _
        // Predicated region
        $region41: #{tpu_custom_call.1} parent=23 // pred_check
          %p351 = pneg %p204
        $region42: #{tpu_custom_call.1} parent=23 // pred_check_branch
          %353 = sbr.rel (%p351) target = $region44
        $region43: #{tpu_custom_call.1} parent=23 // pred_region
          %p354 = scmp.lt.s32.totalorder %s24, 2
          %s355 = scalar_select %p354, %s24, 2
          %s356 = smul.addr %s355, 2
          %s357 = scalar_lea.vmem %s6, %s356
        $region44: #{tpu_custom_call.1} parent=23 // pred_fallthru
          _
      $region24: #{tpu_custom_call.1} parent=5 // pred_fallthru
        _
      %p358 = scmp.le.s32.totalorder 1, %s16
      %p359 = scmp.lt.s32.totalorder %s16, 4
      %p360 = pnand %p358, %p359
      %p361 = pneg %p360
      // Predicated region
      $region45: #{tpu_custom_call.1} parent=5 // pred_check
        _
      $region46: #{tpu_custom_call.1} parent=5 // pred_check_branch
        %363 = sbr.rel (%p360) target = $region48
      $region47: #{tpu_custom_call.1} parent=5 // pred_region
        %s364 = ssub.s32 %s16, 1
        // Predicated region
        $region49: #{tpu_custom_call.1} parent=47 // pred_check
          %p365 = pneg %p54
        $region50: #{tpu_custom_call.1} parent=47 // pred_check_branch
          %367 = sbr.rel (%p365) target = $region52
        $region51: #{tpu_custom_call.1} parent=47 // pred_region
          %368 = dma.done [#allocation5], 128
        $region52: #{tpu_custom_call.1} parent=47 // pred_fallthru
          _
        // Predicated region
        $region53: #{tpu_custom_call.1} parent=47 // pred_check
          %p369 = pneg %p80
        $region54: #{tpu_custom_call.1} parent=47 // pred_check_branch
          %371 = sbr.rel (%p369) target = $region56
        $region55: #{tpu_custom_call.1} parent=47 // pred_region
          %372 = dma.done [#allocation8], 128
        $region56: #{tpu_custom_call.1} parent=47 // pred_fallthru
          _
        %s373 = sand.u32 %s21, 1
        %s374 = scalar_lea.sflag [#allocation5], %s373
        %s375 = sand.u32 %s93, 1
        %s376 = smul.addr %s375, 128
        %s377 = scalar_lea.vmem [#allocation9], %s376
        // Predicated region
        $region57: #{tpu_custom_call.1} parent=47 // pred_check
          %p378 = pneg %p106
        $region58: #{tpu_custom_call.1} parent=47 // pred_check_branch
          %380 = sbr.rel (%p378) target = $region60
        $region59: #{tpu_custom_call.1} parent=47 // pred_region
          %381 = dma.done %s374, 2048
        $region60: #{tpu_custom_call.1} parent=47 // pred_fallthru
          _
        %s382 = sand.u32 %s21, 1
        %s383 = scalar_lea.sflag [#allocation5], %s382
        %s384 = sand.u32 %s145, 1
        %s385 = smul.addr %s384, 128
        %s386 = scalar_lea.vmem [#allocation10], %s385
        // Predicated region
        $region61: #{tpu_custom_call.1} parent=47 // pred_check
          %p387 = pneg %p158
        $region62: #{tpu_custom_call.1} parent=47 // pred_check_branch
          %389 = sbr.rel (%p387) target = $region64
        $region63: #{tpu_custom_call.1} parent=47 // pred_region
          %390 = dma.done %s383, 2048
        $region64: #{tpu_custom_call.1} parent=47 // pred_fallthru
          _
        %s391 = sand.u32 %s21, 1
        %s392 = scalar_lea.sflag [#allocation5], %s391
        %s393 = sand.u32 %s171, 1
        %s394 = smul.addr %s393, 256
        %s395 = scalar_lea.vmem [#allocation11], %s394
        // Predicated region
        $region65: #{tpu_custom_call.1} parent=47 // pred_check
          %p396 = pneg %p184
        $region66: #{tpu_custom_call.1} parent=47 // pred_check_branch
          %398 = sbr.rel (%p396) target = $region68
        $region67: #{tpu_custom_call.1} parent=47 // pred_region
          %399 = dma.done %s392, 4096
        $region68: #{tpu_custom_call.1} parent=47 // pred_fallthru
          _
        %p400 = pneg %p54
        %p401 = pneg %p51
        %p402 = pneg %p80
        %p403 = pneg %p77
        %s404 = sand.u32 %s21, 1
        %s405 = scalar_lea.sflag [#allocation5], %s404
        %s406 = sand.u32 %s93, 1
        %s407 = smul.addr %s406, 128
        %s408 = scalar_lea.vmem [#allocation9], %s407
        %p409 = pneg %p106
        %p410 = pneg %p103
        %p411 = scmp.lt.s32.totalorder %s26, 2
        %s412 = scalar_select %p411, %s26, 2
        %s413 = smul.addr %s412, 2
        %s414 = scalar_lea.vmem %s3, %s413
        %p415 = pneg %p132
        %p416 = pneg %p129
        %s417 = sand.u32 %s21, 1
        %s418 = scalar_lea.sflag [#allocation5], %s417
        %s419 = sand.u32 %s145, 1
        %s420 = smul.addr %s419, 128
        %s421 = scalar_lea.vmem [#allocation10], %s420
        %p422 = pneg %p158
        %p423 = pneg %p155
        %s424 = sand.u32 %s21, 1
        %s425 = scalar_lea.sflag [#allocation5], %s424
        %s426 = sand.u32 %s171, 1
        %s427 = smul.addr %s426, 256
        %s428 = scalar_lea.vmem [#allocation11], %s427
        %p429 = pneg %p184
        %p430 = pneg %p181
        %p431 = scmp.lt.s32.totalorder %s26, 2
        %s432 = scalar_select %p431, %s26, 2
        %s433 = smul.addr %s432, 2
        %s434 = scalar_lea.vmem %s6, %s433
        %p435 = pneg %p210
        %p436 = pneg %p207
        %p437 = pneg %p236
        %p438 = pneg %p233
        %p439 = scmp.lt.s32.totalorder %s26, 2
        %s440 = scalar_select %p439, %s26, 2
        %s441 = smul.addr %s440, 2
        %s442 = scalar_lea.vmem %s3, %s441
        %p443 = scmp.lt.s32.totalorder %s26, 2
        %s444 = scalar_select %p443, %s26, 2
        %s445 = smul.addr %s444, 2
        %s446 = scalar_lea.vmem %s6, %s445
        %p447 = scmp.eq.s32.totalorder %s26, 0
        // Predicated region
        $region69: #{tpu_custom_call.1} parent=47 // pred_check
          %p448 = pneg %p447
        $region70: #{tpu_custom_call.1} parent=47 // pred_check_branch
          %450 = sbr.rel (%p448) target = $region72
        $region71: #{tpu_custom_call.1} parent=47 // pred_region
          %v451 = vld [vmem:[#allocation4] sm:$0xff]
          %452 = vst [vmem:[#allocation2] sm:$0xff] %v451
          %v453 = vld [vmem:[#allocation4] sm:$0xff]
          %455 = vset.pattern.permute.xlu0 0
          %456 = vperm.xlu0 %455, %v453
          %v457 = vpop.permute.xlu0 %456
          %459 = vst [vmem:[#allocation3] sm:$0xff] %v457
        $region72: #{tpu_custom_call.1} parent=47 // pred_fallthru
          _
        %v460 = vld [vmem:[#allocation2] sm:$0xff]
        %v461 = vld [vmem:[%s377] sm:$0xff]
        %v462 = vld [vmem:[%s377 + $0x8] sm:$0xff]
        %v463 = vld [vmem:[%s377 + $0x10] sm:$0xff]
        %v464 = vld [vmem:[%s377 + $0x18] sm:$0xff]
        %v465 = vld [vmem:[%s377 + $0x20] sm:$0xff]
        %v466 = vld [vmem:[%s377 + $0x28] sm:$0xff]
        %v467 = vld [vmem:[%s377 + $0x30] sm:$0xff]
        %v468 = vld [vmem:[%s377 + $0x38] sm:$0xff]
        %v469 = vld [vmem:[%s377 + $0x40] sm:$0xff]
        %v470 = vld [vmem:[%s377 + $0x48] sm:$0xff]
        %v471 = vld [vmem:[%s377 + $0x50] sm:$0xff]
        %v472 = vld [vmem:[%s377 + $0x58] sm:$0xff]
        %v473 = vld [vmem:[%s377 + $0x60] sm:$0xff]
        %v474 = vld [vmem:[%s377 + $0x68] sm:$0xff]
        %v475 = vld [vmem:[%s377 + $0x70] sm:$0xff]
        %v476 = vld [vmem:[%s377 + $0x78] sm:$0xff]
        %v477 = vld [vmem:[%s442] sm:$0x1]
        %v478 = vlaneseq
        %v479 = vshrl.u32 %v478, 7
        %v480 = vsub.s32 0, %v479
        %v481 = vrot.slane %v477, %v480
        %482 = vmatprep.subr.mxu0 0.0
        %483 = vmatpush1.msra.mxu0 %v461
        %484 = vmatprep.subr.mxu0 0.0
        %485 = vmatpush1.msra.mxu0 %v462
        %486 = vmatprep.subr.mxu0 0.0
        %487 = vmatpush1.msra.mxu0 %v463
        %488 = vmatprep.subr.mxu0 0.0
        %489 = vmatpush1.msra.mxu0 %v464
        %490 = vmatprep.subr.mxu0 0.0
        %491 = vmatpush1.msra.mxu0 %v465
        %492 = vmatprep.subr.mxu0 0.0
        %493 = vmatpush1.msra.mxu0 %v466
        %494 = vmatprep.subr.mxu0 0.0
        %495 = vmatpush1.msra.mxu0 %v467
        %496 = vmatprep.subr.mxu0 0.0
        %497 = vmatpush1.msra.mxu0 %v468
        %498 = vmatprep.subr.mxu0 0.0
        %499 = vmatpush1.msra.mxu0 %v469
        %500 = vmatprep.subr.mxu0 0.0
        %501 = vmatpush1.msra.mxu0 %v470
        %502 = vmatprep.subr.mxu0 0.0
        %503 = vmatpush1.msra.mxu0 %v471
        %504 = vmatprep.subr.mxu0 0.0
        %505 = vmatpush1.msra.mxu0 %v472
        %506 = vmatprep.subr.mxu0 0.0
        %507 = vmatpush1.msra.mxu0 %v473
        %508 = vmatprep.subr.mxu0 0.0
        %509 = vmatpush1.msra.mxu0 %v474
        %510 = vmatprep.subr.mxu0 0.0
        %511 = vmatpush1.msra.mxu0 %v475
        %512 = vmatprep.subr.mxu0 0.0
        %513 = vmatpush1.msra.mxu0 %v476
        %514 = vmatprep.subr.mxu0 0.0
        %515 = vmatpush1.msra.mxu0 0.0
        %516 = vmatprep.subr.mxu0 0.0
        %517 = vmatpush1.msra.mxu0 0.0
        %518 = vmatprep.subr.mxu0 0.0
        %519 = vmatpush1.msra.mxu0 0.0
        %520 = vmatprep.subr.mxu0 0.0
        %521 = vmatpush1.msra.mxu0 0.0
        %522 = vmatprep.subr.mxu0 0.0
        %523 = vmatpush1.msra.mxu0 0.0
        %524 = vmatprep.subr.mxu0 0.0
        %525 = vmatpush1.msra.mxu0 0.0
        %526 = vmatprep.subr.mxu0 0.0
        %527 = vmatpush1.msra.mxu0 0.0
        %528 = vmatprep.subr.mxu0 0.0
        %529 = vmatpush1.msra.mxu0 0.0
        %530 = vmatprep.subr.mxu0 0.0
        %531 = vmatpush1.msra.mxu0 0.0
        %532 = vmatprep.subr.mxu0 0.0
        %533 = vmatpush1.msra.mxu0 0.0
        %534 = vmatprep.subr.mxu0 0.0
        %535 = vmatpush1.msra.mxu0 0.0
        %536 = vmatprep.subr.mxu0 0.0
        %537 = vmatpush1.msra.mxu0 0.0
        %538 = vmatprep.subr.mxu0 0.0
        %539 = vmatpush1.msra.mxu0 0.0
        %540 = vmatprep.subr.mxu0 0.0
        %541 = vmatpush1.msra.mxu0 0.0
        %542 = vmatprep.subr.mxu0 0.0
        %543 = vmatpush1.msra.mxu0 0.0
        %544 = vmatprep.subr.mxu0 0.0
        %545 = vmatpush1.msra.mxu0 0.0
        %546 = vmatprep.mubr.f32.mxu0 0.0
        %547 = vmatmul.mubr.f32.gmra.mrb[0].mxu0 %v460
        %v548 = vpop.f32.mrb[0].mxu0
        %v549 = vadd.f32 %v481, %v548
        %v550 = vpop.f32.mrb[0].mxu0
        %551 = vdwg.mxu0
        %v552 = vmax.f32 %v549, 0.0
        %v553 = vld [vmem:[%s386] sm:$0xff]
        %v554 = vld [vmem:[%s386 + $0x8] sm:$0xff]
        %v555 = vld [vmem:[%s386 + $0x10] sm:$0xff]
        %v556 = vld [vmem:[%s386 + $0x18] sm:$0xff]
        %v557 = vld [vmem:[%s386 + $0x20] sm:$0xff]
        %v558 = vld [vmem:[%s386 + $0x28] sm:$0xff]
        %v559 = vld [vmem:[%s386 + $0x30] sm:$0xff]
        %v560 = vld [vmem:[%s386 + $0x38] sm:$0xff]
        %v561 = vld [vmem:[%s386 + $0x40] sm:$0xff]
        %v562 = vld [vmem:[%s386 + $0x48] sm:$0xff]
        %v563 = vld [vmem:[%s386 + $0x50] sm:$0xff]
        %v564 = vld [vmem:[%s386 + $0x58] sm:$0xff]
        %v565 = vld [vmem:[%s386 + $0x60] sm:$0xff]
        %v566 = vld [vmem:[%s386 + $0x68] sm:$0xff]
        %v567 = vld [vmem:[%s386 + $0x70] sm:$0xff]
        %v568 = vld [vmem:[%s386 + $0x78] sm:$0xff]
        %v569 = vld [vmem:[%s442 + $0x1] sm:$0x1]
        %v570 = vlaneseq
        %v571 = vshrl.u32 %v570, 7
        %v572 = vsub.s32 0, %v571
        %v573 = vrot.slane %v569, %v572
        %574 = vmatprep.subr.mxu0 0.0
        %575 = vmatpush1.msra.mxu0 %v553
        %576 = vmatprep.subr.mxu0 0.0
        %577 = vmatpush1.msra.mxu0 %v554
        %578 = vmatprep.subr.mxu0 0.0
        %579 = vmatpush1.msra.mxu0 %v555
        %580 = vmatprep.subr.mxu0 0.0
        %581 = vmatpush1.msra.mxu0 %v556
        %582 = vmatprep.subr.mxu0 0.0
        %583 = vmatpush1.msra.mxu0 %v557
        %584 = vmatprep.subr.mxu0 0.0
        %585 = vmatpush1.msra.mxu0 %v558
        %586 = vmatprep.subr.mxu0 0.0
        %587 = vmatpush1.msra.mxu0 %v559
        %588 = vmatprep.subr.mxu0 0.0
        %589 = vmatpush1.msra.mxu0 %v560
        %590 = vmatprep.subr.mxu0 0.0
        %591 = vmatpush1.msra.mxu0 %v561
        %592 = vmatprep.subr.mxu0 0.0
        %593 = vmatpush1.msra.mxu0 %v562
        %594 = vmatprep.subr.mxu0 0.0
        %595 = vmatpush1.msra.mxu0 %v563
        %596 = vmatprep.subr.mxu0 0.0
        %597 = vmatpush1.msra.mxu0 %v564
        %598 = vmatprep.subr.mxu0 0.0
        %599 = vmatpush1.msra.mxu0 %v565
        %600 = vmatprep.subr.mxu0 0.0
        %601 = vmatpush1.msra.mxu0 %v566
        %602 = vmatprep.subr.mxu0 0.0
        %603 = vmatpush1.msra.mxu0 %v567
        %604 = vmatprep.subr.mxu0 0.0
        %605 = vmatpush1.msra.mxu0 %v568
        %606 = vmatprep.subr.mxu0 0.0
        %607 = vmatpush1.msra.mxu0 0.0
        %608 = vmatprep.subr.mxu0 0.0
        %609 = vmatpush1.msra.mxu0 0.0
        %610 = vmatprep.subr.mxu0 0.0
        %611 = vmatpush1.msra.mxu0 0.0
        %612 = vmatprep.subr.mxu0 0.0
        %613 = vmatpush1.msra.mxu0 0.0
        %614 = vmatprep.subr.mxu0 0.0
        %615 = vmatpush1.msra.mxu0 0.0
        %616 = vmatprep.subr.mxu0 0.0
        %617 = vmatpush1.msra.mxu0 0.0
        %618 = vmatprep.subr.mxu0 0.0
        %619 = vmatpush1.msra.mxu0 0.0
        %620 = vmatprep.subr.mxu0 0.0
        %621 = vmatpush1.msra.mxu0 0.0
        %622 = vmatprep.subr.mxu0 0.0
        %623 = vmatpush1.msra.mxu0 0.0
        %624 = vmatprep.subr.mxu0 0.0
        %625 = vmatpush1.msra.mxu0 0.0
        %626 = vmatprep.subr.mxu0 0.0
        %627 = vmatpush1.msra.mxu0 0.0
        %628 = vmatprep.subr.mxu0 0.0
        %629 = vmatpush1.msra.mxu0 0.0
        %630 = vmatprep.subr.mxu0 0.0
        %631 = vmatpush1.msra.mxu0 0.0
        %632 = vmatprep.subr.mxu0 0.0
        %633 = vmatpush1.msra.mxu0 0.0
        %634 = vmatprep.subr.mxu0 0.0
        %635 = vmatpush1.msra.mxu0 0.0
        %636 = vmatprep.subr.mxu0 0.0
        %637 = vmatpush1.msra.mxu0 0.0
        %638 = vmatprep.mubr.f32.mxu0 0.0
        %639 = vmatmul.mubr.f32.gmra.mrb[0].mxu0 %v552
        %v640 = vpop.f32.mrb[0].mxu0
        %v641 = vadd.f32 %v573, %v640
        %v642 = vpop.f32.mrb[0].mxu0
        %643 = vdwg.mxu0
        %v644 = vmax.f32 %v641, 0.0
        %v645 = vld [vmem:[%s395] sm:$0xff]
        %v646 = vld [vmem:[%s395 + $0x8] sm:$0xff]
        %v647 = vld [vmem:[%s395 + $0x10] sm:$0xff]
        %v648 = vld [vmem:[%s395 + $0x18] sm:$0xff]
        %v649 = vld [vmem:[%s395 + $0x20] sm:$0xff]
        %v650 = vld [vmem:[%s395 + $0x28] sm:$0xff]
        %v651 = vld [vmem:[%s395 + $0x30] sm:$0xff]
        %v652 = vld [vmem:[%s395 + $0x38] sm:$0xff]
        %v653 = vld [vmem:[%s395 + $0x40] sm:$0xff]
        %v654 = vld [vmem:[%s395 + $0x48] sm:$0xff]
        %v655 = vld [vmem:[%s395 + $0x50] sm:$0xff]
        %v656 = vld [vmem:[%s395 + $0x58] sm:$0xff]
        %v657 = vld [vmem:[%s395 + $0x60] sm:$0xff]
        %v658 = vld [vmem:[%s395 + $0x68] sm:$0xff]
        %v659 = vld [vmem:[%s395 + $0x70] sm:$0xff]
        %v660 = vld [vmem:[%s395 + $0x78] sm:$0xff]
        %v661 = vld [vmem:[%s395 + $0x80] sm:$0xff]
        %v662 = vld [vmem:[%s395 + $0x88] sm:$0xff]
        %v663 = vld [vmem:[%s395 + $0x90] sm:$0xff]
        %v664 = vld [vmem:[%s395 + $0x98] sm:$0xff]
        %v665 = vld [vmem:[%s395 + $0xa0] sm:$0xff]
        %v666 = vld [vmem:[%s395 + $0xa8] sm:$0xff]
        %v667 = vld [vmem:[%s395 + $0xb0] sm:$0xff]
        %v668 = vld [vmem:[%s395 + $0xb8] sm:$0xff]
        %v669 = vld [vmem:[%s395 + $0xc0] sm:$0xff]
        %v670 = vld [vmem:[%s395 + $0xc8] sm:$0xff]
        %v671 = vld [vmem:[%s395 + $0xd0] sm:$0xff]
        %v672 = vld [vmem:[%s395 + $0xd8] sm:$0xff]
        %v673 = vld [vmem:[%s395 + $0xe0] sm:$0xff]
        %v674 = vld [vmem:[%s395 + $0xe8] sm:$0xff]
        %v675 = vld [vmem:[%s395 + $0xf0] sm:$0xff]
        %v676 = vld [vmem:[%s395 + $0xf8] sm:$0xff]
        %v677 = vld [vmem:[%s446] sm:$0x3]
        %v679 = vlaneseq
        %v680 = vshrl.u32 %v679, 7
        %v681 = vsub.s32 0, %v680
        %v682 = vrot.slane %v677, %v681
        %v683 = vlaneseq
        %v684 = vshrl.u32 %v683, 7
        %v685 = vsub.s32 1, %v684
        %v686 = vrot.slane %v677, %v685
        %689 = vmatprep.subr.mxu0 %v646
        %690 = vmatpush1.msra.mxu0 %v645
        %691 = vmatprep.subr.mxu0 %v648
        %692 = vmatpush1.msra.mxu0 %v647
        %693 = vmatprep.subr.mxu0 %v650
        %694 = vmatpush1.msra.mxu0 %v649
        %695 = vmatprep.subr.mxu0 %v652
        %696 = vmatpush1.msra.mxu0 %v651
        %697 = vmatprep.subr.mxu0 %v654
        %698 = vmatpush1.msra.mxu0 %v653
        %699 = vmatprep.subr.mxu0 %v656
        %700 = vmatpush1.msra.mxu0 %v655
        %701 = vmatprep.subr.mxu0 %v658
        %702 = vmatpush1.msra.mxu0 %v657
        %703 = vmatprep.subr.mxu0 %v660
        %704 = vmatpush1.msra.mxu0 %v659
        %705 = vmatprep.subr.mxu0 %v662
        %706 = vmatpush1.msra.mxu0 %v661
        %707 = vmatprep.subr.mxu0 %v664
        %708 = vmatpush1.msra.mxu0 %v663
        %709 = vmatprep.subr.mxu0 %v666
        %710 = vmatpush1.msra.mxu0 %v665
        %711 = vmatprep.subr.mxu0 %v668
        %712 = vmatpush1.msra.mxu0 %v667
        %713 = vmatprep.subr.mxu0 %v670
        %714 = vmatpush1.msra.mxu0 %v669
        %715 = vmatprep.subr.mxu0 %v672
        %716 = vmatpush1.msra.mxu0 %v671
        %717 = vmatprep.subr.mxu0 %v674
        %718 = vmatpush1.msra.mxu0 %v673
        %719 = vmatprep.subr.mxu0 %v676
        %720 = vmatpush1.msra.mxu0 %v675
        %721 = vmatprep.subr.mxu0 0.0
        %722 = vmatpush1.msra.mxu0 0.0
        %723 = vmatprep.subr.mxu0 0.0
        %724 = vmatpush1.msra.mxu0 0.0
        %725 = vmatprep.subr.mxu0 0.0
        %726 = vmatpush1.msra.mxu0 0.0
        %727 = vmatprep.subr.mxu0 0.0
        %728 = vmatpush1.msra.mxu0 0.0
        %729 = vmatprep.subr.mxu0 0.0
        %730 = vmatpush1.msra.mxu0 0.0
        %731 = vmatprep.subr.mxu0 0.0
        %732 = vmatpush1.msra.mxu0 0.0
        %733 = vmatprep.subr.mxu0 0.0
        %734 = vmatpush1.msra.mxu0 0.0
        %735 = vmatprep.subr.mxu0 0.0
        %736 = vmatpush1.msra.mxu0 0.0
        %737 = vmatprep.subr.mxu0 0.0
        %738 = vmatpush1.msra.mxu0 0.0
        %739 = vmatprep.subr.mxu0 0.0
        %740 = vmatpush1.msra.mxu0 0.0
        %741 = vmatprep.subr.mxu0 0.0
        %742 = vmatpush1.msra.mxu0 0.0
        %743 = vmatprep.subr.mxu0 0.0
        %744 = vmatpush1.msra.mxu0 0.0
        %745 = vmatprep.subr.mxu0 0.0
        %746 = vmatpush1.msra.mxu0 0.0
        %747 = vmatprep.subr.mxu0 0.0
        %748 = vmatpush1.msra.mxu0 0.0
        %749 = vmatprep.subr.mxu0 0.0
        %750 = vmatpush1.msra.mxu0 0.0
        %751 = vmatprep.subr.mxu0 0.0
        %752 = vmatpush1.msra.mxu0 0.0
        %753 = vmatprep.mubr.f32.mxu0 0.0
        %754 = vmatmul.mubr.f32.gmra.mrb[0].mxu0 %v644
        %v755 = vpop.f32.mrb[0].mxu0
        %v756 = vadd.f32 %v682, %v755
        %v757 = vpop.f32.mrb[0].mxu0
        %v758 = vadd.f32 %v686, %v757
        %759 = vdwg.mxu0
        %v760 = vsub.f32 %v460, %v756
        %v761 = vld [vmem:[#allocation7] sm:$0xff]
        %v762 = vmul.f32 %v760, %v761
        %763 = vst [vmem:[#allocation2] sm:$0xff] %v762
        %v764 = vld [vmem:[#allocation3] sm:$0xff]
        %v765 = vadd.f32 %v764, %v758
        %766 = vst [vmem:[#allocation3] sm:$0xff] %v765
        %p767 = scmp.eq.s32.totalorder %s26, 2
        // Predicated region
        $region73: #{tpu_custom_call.1} parent=47 // pred_check
          %p768 = pneg %p767
        $region74: #{tpu_custom_call.1} parent=47 // pred_check_branch
          %770 = sbr.rel (%p768) target = $region76
        $region75: #{tpu_custom_call.1} parent=47 // pred_region
          %v771 = vld [vmem:[#allocation3] sm:$0xff]
          %772 = vst [vmem:[#allocation12] sm:$0xff] %v771
        $region76: #{tpu_custom_call.1} parent=47 // pred_fallthru
          _
        // Predicated region
        $region77: #{tpu_custom_call.1} parent=47 // pred_check
          %p773 = pneg %p233
        $region78: #{tpu_custom_call.1} parent=47 // pred_check_branch
          %775 = sbr.rel (%p773) target = $region80
        $region79: #{tpu_custom_call.1} parent=47 // pred_region
          %s777 = ssub.s32 128, 128
          %778 = vsyncadd [#allocation6], %s777
          %s779 = smul.addr %s25, 128
          %s780 = scalar_lea.hbm %s7, %s779
          %s782 = sshll.u32 [#allocation12], 4
          %s783 = int_to_ptr.vmem [resolvable:$true] %s782
          %785 = dma.vmem_to_hbm [thread:$0]  %s783, 128, %s780, [#allocation6]
        $region80: #{tpu_custom_call.1} parent=47 // pred_fallthru
          _
        // Predicated region
        $region81: #{tpu_custom_call.1} parent=47 // pred_check
          %p786 = pneg %p233
        $region82: #{tpu_custom_call.1} parent=47 // pred_check_branch
          %788 = sbr.rel (%p786) target = $region84
        $region83: #{tpu_custom_call.1} parent=47 // pred_region
          %789 = dma.done [#allocation6], 128
        $region84: #{tpu_custom_call.1} parent=47 // pred_fallthru
          _
      $region48: #{tpu_custom_call.1} parent=5 // pred_fallthru
        _
      %p790 = scmp.le.s32.totalorder 2, %s16
      // Predicated region
      $region85: #{tpu_custom_call.1} parent=5 // pred_check
        %p791 = pneg %p790
      $region86: #{tpu_custom_call.1} parent=5 // pred_check_branch
        %793 = sbr.rel (%p791) target = $region88
      $region87: #{tpu_custom_call.1} parent=5 // pred_region
        %s794 = ssub.s32 %s16, 2
      $region88: #{tpu_custom_call.1} parent=5 // pred_fallthru
        _
    $region6: #{tpu_custom_call.1} parent=1 // loop_footer
      %s20 = sadd.s32 1, %s16
    $region7: #{tpu_custom_call.1} parent=1 // loop_footer_branch
      %15 = sbr.rel target = $region3
    $region8: #{tpu_custom_call.1} parent=1 // loop_exit
      _
    %795 = vsyncpa [#allocation5], 1
    %s796 = scalar_lea.sflag [#allocation5], 1
    %797 = vsyncpa %s796, 1
    %798 = vsyncpa [#allocation8], 1
    %799 = vsyncpa [#allocation6], 1
    %s800 = scalar_lea.sflag [#allocation6], 1
    %801 = vsyncpa %s800, 1

</llo_original>
